<compile_context>
chip_gen: v5e
topology: v5e:2x2
jax: 0.10.0
libtpu: 0.0.40
codegen_flags: <defaults>
</compile_context>

<pallas_src>
import functools

import jax
import jax.numpy as jnp
from jax.experimental import pallas as pl
from jax.experimental.pallas import tpu as pltpu


def _round_up(x, m):
    return (x + m - 1) // m * m


def _sublane(dtype):
    # sublane packing multiple: 8 for 4-byte dtypes, 16 for 2-byte, 32 for 1-byte.
    return 8 * (4 // jnp.dtype(dtype).itemsize)


# -----------------------------------------------------------------------------
# Kernel: in-VMEM tap formation + k*k MXU matmuls + folded-BN bias + SiLU.
# -----------------------------------------------------------------------------
def _conv_bn_silu_kernel(x_ref, w_ref, b_ref, o_ref, *, taps, cin_p, m_out):
    # x_ref: (n_phases*Cin_p, FLAT)  phase-major, spatially-flat padded image (compute dtype)
    # w_ref: (kh*kw, Cout_p, Cin_p)  BN-folded conv weights, tap-major
    # b_ref: (Cout_p, 1) f32         folded BN bias
    # o_ref: (Cout_p, M_out)         lane-dense output slab for this image
    acc = None
    for t, p, off in taps:                      # static Python loop over the k*k taps
        xt = x_ref[p * cin_p:(p + 1) * cin_p, off:off + m_out]   # (Cin_p, M_out)
        y = jnp.dot(w_ref[t], xt, preferred_element_type=jnp.float32)
        acc = y if acc is None else acc + y
    acc = acc + b_ref[...]                      # f32 bias, broadcast over lanes
    # SiLU(x) = x / (1 + exp(-x));  epilogue kept in f32, cast only at the store.
    o_ref[...] = (acc / (1.0 + jnp.exp(-acc))).astype(o_ref.dtype)


# -----------------------------------------------------------------------------
# Wrapper: ConvBNAct forward (Conv2d pad=(k-1)//2, groups=1, bias=False -> BN -> SiLU)
# -----------------------------------------------------------------------------
def conv_bn_act(x_nchw, w_oihw, bn_params, *, stride=1,
                compute_dtype=jnp.bfloat16, out_dtype=None):
    if out_dtype is None:
        out_dtype = x_nchw.dtype
    gamma, beta, mean, var, eps = bn_params
    scale = gamma / jnp.sqrt(var + eps)
    w_f = w_oihw.astype(jnp.float32) * scale[:, None, None, None]   # fold BN scale
    bias = (beta - mean * scale).astype(jnp.float32)                # folded BN bias

    n, cin, h, wdt = x_nchw.shape
    cout, _, kh, kw = w_oihw.shape
    s = int(stride)
    ph, pw = (kh - 1) // 2, (kw - 1) // 2
    ho = (h + 2 * ph - kh) // s + 1
    wo = (wdt + 2 * pw - kw) // s + 1
    qy_max, qx_max = (kh - 1) // s, (kw - 1) // s
    ha, wa = ho + qy_max, wo + qx_max            # per-phase row/col extents

    cin_p = _round_up(cin, _sublane(compute_dtype))
    cout_p = _round_up(cout, _sublane(out_dtype))
    m_out = _round_up(ho * wa, 128)              # lane-dense output width per image
    off_max = qy_max * wa + qx_max
    flat = _round_up(off_max + m_out, 128)       # keeps every tap slice in bounds

    # --- phase-decomposed, spatially-flat input slab (single HBM pass, bf16) --------
    xp = jnp.pad(x_nchw.astype(compute_dtype),
                 ((0, 0), (0, 0), (ph, ph), (pw, pw)))
    he, we = s * ha, s * wa                      # crop-or-pad padded input to phase grid
    xp = xp[:, :, :he, :we]
    xp = jnp.pad(xp, ((0, 0), (0, 0), (0, he - xp.shape[2]), (0, we - xp.shape[3])))
    used_phases = sorted({(dy % s) * s + (dx % s)
                          for dy in range(kh) for dx in range(kw)})
    phase_pos = {p: i for i, p in enumerate(used_phases)}
    nph = len(used_phases)
    phases = [xp[:, :, p // s::s, p % s::s] for p in used_phases]   # each (N,Cin,HA,WA)
    xph = jnp.stack(phases, axis=1).reshape(n, nph, cin, ha * wa)
    xph = jnp.pad(xph, ((0, 0), (0, 0), (0, cin_p - cin), (0, flat - ha * wa)))
    xph = xph.reshape(n, nph * cin_p, flat)

    # --- BN-folded weights (tap-major) + f32 bias ------------------------------------
    w_t = jnp.transpose(w_f, (2, 3, 0, 1)).reshape(kh * kw, cout, cin)
    w_t = jnp.pad(w_t, ((0, 0), (0, cout_p - cout), (0, cin_p - cin))).astype(compute_dtype)
    b_t = jnp.pad(bias, (0, cout_p - cout)).reshape(cout_p, 1)

    # static tap table: (weight tap index, phase slot, flat lane offset)
    taps = tuple((dy * kw + dx,
                  phase_pos[(dy % s) * s + (dx % s)],
                  (dy // s) * wa + (dx // s))
                 for dy in range(kh) for dx in range(kw))

    # --- explicit VMEM budget (double-buffered blocks + in-kernel tap temporaries) ---
    cb, ob = jnp.dtype(compute_dtype).itemsize, jnp.dtype(out_dtype).itemsize
    est = (2 * (nph * cin_p * flat * cb + cout_p * m_out * ob
                + kh * kw * cout_p * cin_p * cb)
           + kh * kw * cin_p * m_out * cb + 2 * cout_p * m_out * 4 + (8 << 20))
    vmem_limit = int(min(max(est, 32 << 20), 96 << 20))

    kern = functools.partial(_conv_bn_silu_kernel, taps=taps, cin_p=cin_p, m_out=m_out)
    out3 = pl.pallas_call(
        kern,
        out_shape=jax.ShapeDtypeStruct((n, cout_p, m_out), out_dtype),
        grid=(n,),                                        # one image per step
        in_specs=[
            pl.BlockSpec((None, nph * cin_p, flat), lambda i: (i, 0, 0)),
            pl.BlockSpec((kh * kw, cout_p, cin_p), lambda i: (0, 0, 0)),
            pl.BlockSpec((cout_p, 1), lambda i: (0, 0)),
        ],
        out_specs=pl.BlockSpec((None, cout_p, m_out), lambda i: (i, 0, 0)),
        compiler_params=pltpu.CompilerParams(
            dimension_semantics=("parallel",),            # v7x: shard images over 2 TCs
            vmem_limit_bytes=vmem_limit),
    )(xph, w_t, b_t)

    # (N, Cout_p, M_out) is already NCHW-ordered: drop channel/lane padding + garbage cols.
    out = out3[:, :cout, :ho * wa].reshape(n, cout, ho, wa)[:, :, :, :wo]
    return out


# -----------------------------------------------------------------------------
# Pure-JAX reference (unfused Conv -> BN(eval) -> SiLU), full f32 precision.
# -----------------------------------------------------------------------------
def conv_bn_act_ref(x_nchw, w_oihw, bn_params, *, stride=1):
    gamma, beta, mean, var, eps = bn_params
    kh, kw = w_oihw.shape[2], w_oihw.shape[3]
    ph, pw = (kh - 1) // 2, (kw - 1) // 2
    y = jax.lax.conv_general_dilated(
        x_nchw.astype(jnp.float32), w_oihw.astype(jnp.float32), (stride, stride),
        [(ph, ph), (pw, pw)], dimension_numbers=("NCHW", "OIHW", "NCHW"),
        precision=jax.lax.Precision.HIGHEST)
    inv = (gamma / jnp.sqrt(var + eps))[None, :, None, None]
    y = (y - mean[None, :, None, None]) * inv + beta[None, :, None, None]
    return y * jax.nn.sigmoid(y)


# -----------------------------------------------------------------------------
# Deterministic synthetic parameters (Conv2d weight + BatchNorm2d stats)
# -----------------------------------------------------------------------------
def init_conv_bn_act_params(key, cin, cout, k):
    kw_, kg, kb, km, kv = jax.random.split(key, 5)
    w = jax.random.normal(kw_, (cout, cin, k, k), jnp.float32) * 0.1
    gamma = jax.random.uniform(kg, (cout,), jnp.float32, 0.5, 1.5)
    beta = jax.random.normal(kb, (cout,), jnp.float32) * 0.1
    mean = jax.random.normal(km, (cout,), jnp.float32) * 0.1
    var = jax.random.uniform(kv, (cout,), jnp.float32, 0.5, 1.5)
    eps = 1e-5  # nn.BatchNorm2d default
    return w, (gamma, beta, mean, var, eps)


if __name__ == "__main__":
    key = jax.random.PRNGKey(0)
    kx, kp = jax.random.split(key)

    x = jax.random.normal(kx, (2, 4, 16, 16), jnp.float32)   # NCHW, like PyTorch

    # (cout, ksize, stride, compute_dtype): k=3 SAME, k=1 pointwise, stride=2, plus an
    # f32-compute run.  Tolerance 5e-2 covers bf16 operand rounding of the streamed
    # matmul inputs; layout/indexing/BN-fold bugs would show up as O(1) errors.
    cases = [
        (8, 3, 1, jnp.bfloat16),
        (8, 1, 1, jnp.bfloat16),
        (16, 3, 2, jnp.bfloat16),
        (8, 3, 1, jnp.float32),
    ]
    for cout, ks, st, cdt in cases:
        kk = jax.random.fold_in(kp, cout * 100 + ks * 10 + st)
        w, bn = init_conv_bn_act_params(kk, x.shape[1], cout, ks)

        fn = jax.jit(functools.partial(conv_bn_act, stride=st, compute_dtype=cdt))
        out = jax.block_until_ready(fn(x, w, bn))
        ref = jax.block_until_ready(conv_bn_act_ref(x, w, bn, stride=st))

        assert out.shape == ref.shape, (out.shape, ref.shape)
        err = float(jnp.max(jnp.abs(out.astype(jnp.float32) - ref)))
        assert jnp.allclose(out.astype(jnp.float32), ref, rtol=5e-2, atol=5e-2), \
            (cout, ks, st, str(cdt), err)

    print("KERNEL_OK")
</pallas_src>

<mosaic_0001>
module attributes {stable_mosaic.version = 11 : i64} {
  func.func @_conv_bn_silu_kernel(%arg0: i32, %arg1: memref<1x16x512xbf16, #tpu.memory_space<vmem>>, %arg2: memref<9x8x16xbf16, #tpu.memory_space<vmem>>, %arg3: memref<8x1xf32, #tpu.memory_space<vmem>>, %arg4: memref<1x8x384xf32, #tpu.memory_space<vmem>>) attributes {dimension_semantics = [#tpu.dimension_semantics<parallel>], iteration_bounds = array<i64: 2>, scalar_prefetch = 0 : i64, scratch_operands = 0 : i64, tpu.core_type = #tpu.core_type<tc>, window_params = [{transform_indices = @transform_0, window_bounds = array<i64: 1, 16, 512>}, {pipeline_mode = #tpu.pipeline_mode<synchronous>, transform_indices = @transform_1, window_bounds = array<i64: 9, 8, 16>}, {pipeline_mode = #tpu.pipeline_mode<synchronous>, transform_indices = @transform_2, window_bounds = array<i64: 8, 1>}, {transform_indices = @transform_3, window_bounds = array<i64: 1, 8, 384>}]} {
    %c0 = arith.constant 0 : index
    %c0_0 = arith.constant 0 : index
    %c0_1 = arith.constant 0 : index
    %0 = vector.load %arg1[%c0, %c0_0, %c0_1] : memref<1x16x512xbf16, #tpu.memory_space<vmem>>, vector<1x16x384xbf16>
    %1 = vector.shape_cast %0 : vector<1x16x384xbf16> to vector<16x384xbf16>
    %c0_2 = arith.constant 0 : index
    %c0_3 = arith.constant 0 : index
    %c0_4 = arith.constant 0 : index
    %2 = vector.load %arg2[%c0_2, %c0_3, %c0_4] : memref<9x8x16xbf16, #tpu.memory_space<vmem>>, vector<1x8x16xbf16>
    %3 = vector.shape_cast %2 : vector<1x8x16xbf16> to vector<8x16xbf16>
    %cst = arith.constant dense<0.000000e+00> : vector<8x384xf32>
    %4 = tpu.matmul %3, %1, %cst {dimension_numbers = #tpu.dot_dimension_numbers<[1], [0], [0], [1], [0, 0, 1, 1], [], []>} : vector<8x16xbf16>, vector<16x384xbf16>, vector<8x384xf32> -> vector<8x384xf32>
    %c0_5 = arith.constant 0 : index
    %c0_6 = arith.constant 0 : index
    %c1 = arith.constant 1 : index
    %5 = vector.load %arg1[%c0_5, %c0_6, %c1] : memref<1x16x512xbf16, #tpu.memory_space<vmem>>, vector<1x16x384xbf16>
    %6 = vector.shape_cast %5 : vector<1x16x384xbf16> to vector<16x384xbf16>
    %c1_7 = arith.constant 1 : index
    %c0_8 = arith.constant 0 : index
    %c0_9 = arith.constant 0 : index
    %7 = vector.load %arg2[%c1_7, %c0_8, %c0_9] : memref<9x8x16xbf16, #tpu.memory_space<vmem>>, vector<1x8x16xbf16>
    %8 = vector.shape_cast %7 : vector<1x8x16xbf16> to vector<8x16xbf16>
    %cst_10 = arith.constant dense<0.000000e+00> : vector<8x384xf32>
    %9 = tpu.matmul %8, %6, %cst_10 {dimension_numbers = #tpu.dot_dimension_numbers<[1], [0], [0], [1], [0, 0, 1, 1], [], []>} : vector<8x16xbf16>, vector<16x384xbf16>, vector<8x384xf32> -> vector<8x384xf32>
    %10 = arith.addf %4, %9 : vector<8x384xf32>
    %c0_11 = arith.constant 0 : index
    %c0_12 = arith.constant 0 : index
    %c2 = arith.constant 2 : index
    %11 = vector.load %arg1[%c0_11, %c0_12, %c2] : memref<1x16x512xbf16, #tpu.memory_space<vmem>>, vector<1x16x384xbf16>
    %12 = vector.shape_cast %11 : vector<1x16x384xbf16> to vector<16x384xbf16>
    %c2_13 = arith.constant 2 : index
    %c0_14 = arith.constant 0 : index
    %c0_15 = arith.constant 0 : index
    %13 = vector.load %arg2[%c2_13, %c0_14, %c0_15] : memref<9x8x16xbf16, #tpu.memory_space<vmem>>, vector<1x8x16xbf16>
    %14 = vector.shape_cast %13 : vector<1x8x16xbf16> to vector<8x16xbf16>
    %cst_16 = arith.constant dense<0.000000e+00> : vector<8x384xf32>
    %15 = tpu.matmul %14, %12, %cst_16 {dimension_numbers = #tpu.dot_dimension_numbers<[1], [0], [0], [1], [0, 0, 1, 1], [], []>} : vector<8x16xbf16>, vector<16x384xbf16>, vector<8x384xf32> -> vector<8x384xf32>
    %16 = arith.addf %10, %15 : vector<8x384xf32>
    %c0_17 = arith.constant 0 : index
    %c0_18 = arith.constant 0 : index
    %c18 = arith.constant 18 : index
    %17 = vector.load %arg1[%c0_17, %c0_18, %c18] : memref<1x16x512xbf16, #tpu.memory_space<vmem>>, vector<1x16x384xbf16>
    %18 = vector.shape_cast %17 : vector<1x16x384xbf16> to vector<16x384xbf16>
    %c3 = arith.constant 3 : index
    %c0_19 = arith.constant 0 : index
    %c0_20 = arith.constant 0 : index
    %19 = vector.load %arg2[%c3, %c0_19, %c0_20] : memref<9x8x16xbf16, #tpu.memory_space<vmem>>, vector<1x8x16xbf16>
    %20 = vector.shape_cast %19 : vector<1x8x16xbf16> to vector<8x16xbf16>
    %cst_21 = arith.constant dense<0.000000e+00> : vector<8x384xf32>
    %21 = tpu.matmul %20, %18, %cst_21 {dimension_numbers = #tpu.dot_dimension_numbers<[1], [0], [0], [1], [0, 0, 1, 1], [], []>} : vector<8x16xbf16>, vector<16x384xbf16>, vector<8x384xf32> -> vector<8x384xf32>
    %22 = arith.addf %16, %21 : vector<8x384xf32>
    %c0_22 = arith.constant 0 : index
    %c0_23 = arith.constant 0 : index
    %c19 = arith.constant 19 : index
    %23 = vector.load %arg1[%c0_22, %c0_23, %c19] : memref<1x16x512xbf16, #tpu.memory_space<vmem>>, vector<1x16x384xbf16>
    %24 = vector.shape_cast %23 : vector<1x16x384xbf16> to vector<16x384xbf16>
    %c4 = arith.constant 4 : index
    %c0_24 = arith.constant 0 : index
    %c0_25 = arith.constant 0 : index
    %25 = vector.load %arg2[%c4, %c0_24, %c0_25] : memref<9x8x16xbf16, #tpu.memory_space<vmem>>, vector<1x8x16xbf16>
    %26 = vector.shape_cast %25 : vector<1x8x16xbf16> to vector<8x16xbf16>
    %cst_26 = arith.constant dense<0.000000e+00> : vector<8x384xf32>
    %27 = tpu.matmul %26, %24, %cst_26 {dimension_numbers = #tpu.dot_dimension_numbers<[1], [0], [0], [1], [0, 0, 1, 1], [], []>} : vector<8x16xbf16>, vector<16x384xbf16>, vector<8x384xf32> -> vector<8x384xf32>
    %28 = arith.addf %22, %27 : vector<8x384xf32>
    %c0_27 = arith.constant 0 : index
    %c0_28 = arith.constant 0 : index
    %c20 = arith.constant 20 : index
    %29 = vector.load %arg1[%c0_27, %c0_28, %c20] : memref<1x16x512xbf16, #tpu.memory_space<vmem>>, vector<1x16x384xbf16>
    %30 = vector.shape_cast %29 : vector<1x16x384xbf16> to vector<16x384xbf16>
    %c5 = arith.constant 5 : index
    %c0_29 = arith.constant 0 : index
    %c0_30 = arith.constant 0 : index
    %31 = vector.load %arg2[%c5, %c0_29, %c0_30] : memref<9x8x16xbf16, #tpu.memory_space<vmem>>, vector<1x8x16xbf16>
    %32 = vector.shape_cast %31 : vector<1x8x16xbf16> to vector<8x16xbf16>
    %cst_31 = arith.constant dense<0.000000e+00> : vector<8x384xf32>
    %33 = tpu.matmul %32, %30, %cst_31 {dimension_numbers = #tpu.dot_dimension_numbers<[1], [0], [0], [1], [0, 0, 1, 1], [], []>} : vector<8x16xbf16>, vector<16x384xbf16>, vector<8x384xf32> -> vector<8x384xf32>
    %34 = arith.addf %28, %33 : vector<8x384xf32>
    %c0_32 = arith.constant 0 : index
    %c0_33 = arith.constant 0 : index
    %c36 = arith.constant 36 : index
    %35 = vector.load %arg1[%c0_32, %c0_33, %c36] : memref<1x16x512xbf16, #tpu.memory_space<vmem>>, vector<1x16x384xbf16>
    %36 = vector.shape_cast %35 : vector<1x16x384xbf16> to vector<16x384xbf16>
    %c6 = arith.constant 6 : index
    %c0_34 = arith.constant 0 : index
    %c0_35 = arith.constant 0 : index
    %37 = vector.load %arg2[%c6, %c0_34, %c0_35] : memref<9x8x16xbf16, #tpu.memory_space<vmem>>, vector<1x8x16xbf16>
    %38 = vector.shape_cast %37 : vector<1x8x16xbf16> to vector<8x16xbf16>
    %cst_36 = arith.constant dense<0.000000e+00> : vector<8x384xf32>
    %39 = tpu.matmul %38, %36, %cst_36 {dimension_numbers = #tpu.dot_dimension_numbers<[1], [0], [0], [1], [0, 0, 1, 1], [], []>} : vector<8x16xbf16>, vector<16x384xbf16>, vector<8x384xf32> -> vector<8x384xf32>
    %40 = arith.addf %34, %39 : vector<8x384xf32>
    %c0_37 = arith.constant 0 : index
    %c0_38 = arith.constant 0 : index
    %c37 = arith.constant 37 : index
    %41 = vector.load %arg1[%c0_37, %c0_38, %c37] : memref<1x16x512xbf16, #tpu.memory_space<vmem>>, vector<1x16x384xbf16>
    %42 = vector.shape_cast %41 : vector<1x16x384xbf16> to vector<16x384xbf16>
    %c7 = arith.constant 7 : index
    %c0_39 = arith.constant 0 : index
    %c0_40 = arith.constant 0 : index
    %43 = vector.load %arg2[%c7, %c0_39, %c0_40] : memref<9x8x16xbf16, #tpu.memory_space<vmem>>, vector<1x8x16xbf16>
    %44 = vector.shape_cast %43 : vector<1x8x16xbf16> to vector<8x16xbf16>
    %cst_41 = arith.constant dense<0.000000e+00> : vector<8x384xf32>
    %45 = tpu.matmul %44, %42, %cst_41 {dimension_numbers = #tpu.dot_dimension_numbers<[1], [0], [0], [1], [0, 0, 1, 1], [], []>} : vector<8x16xbf16>, vector<16x384xbf16>, vector<8x384xf32> -> vector<8x384xf32>
    %46 = arith.addf %40, %45 : vector<8x384xf32>
    %c0_42 = arith.constant 0 : index
    %c0_43 = arith.constant 0 : index
    %c38 = arith.constant 38 : index
    %47 = vector.load %arg1[%c0_42, %c0_43, %c38] : memref<1x16x512xbf16, #tpu.memory_space<vmem>>, vector<1x16x384xbf16>
    %48 = vector.shape_cast %47 : vector<1x16x384xbf16> to vector<16x384xbf16>
    %c8 = arith.constant 8 : index
    %c0_44 = arith.constant 0 : index
    %c0_45 = arith.constant 0 : index
    %49 = vector.load %arg2[%c8, %c0_44, %c0_45] : memref<9x8x16xbf16, #tpu.memory_space<vmem>>, vector<1x8x16xbf16>
    %50 = vector.shape_cast %49 : vector<1x8x16xbf16> to vector<8x16xbf16>
    %cst_46 = arith.constant dense<0.000000e+00> : vector<8x384xf32>
    %51 = tpu.matmul %50, %48, %cst_46 {dimension_numbers = #tpu.dot_dimension_numbers<[1], [0], [0], [1], [0, 0, 1, 1], [], []>} : vector<8x16xbf16>, vector<16x384xbf16>, vector<8x384xf32> -> vector<8x384xf32>
    %52 = arith.addf %46, %51 : vector<8x384xf32>
    %c0_47 = arith.constant 0 : index
    %c0_48 = arith.constant 0 : index
    %53 = vector.load %arg3[%c0_47, %c0_48] : memref<8x1xf32, #tpu.memory_space<vmem>>, vector<8x1xf32>
    %54 = vector.broadcast %53 : vector<8x1xf32> to vector<8x384xf32>
    %55 = arith.addf %52, %54 : vector<8x384xf32>
    %cst_49 = arith.constant 0.000000e+00 : f32
    %56 = vector.broadcast %cst_49 : f32 to vector<8x384xf32>
    %57 = arith.subf %56, %55 : vector<8x384xf32>
    %58 = math.exp %57 : vector<8x384xf32>
    %cst_50 = arith.constant 1.000000e+00 : f32
    %59 = vector.broadcast %cst_50 : f32 to vector<8x384xf32>
    %60 = arith.addf %59, %58 : vector<8x384xf32>
    %61 = arith.divf %55, %60 : vector<8x384xf32>
    %c0_51 = arith.constant 0 : index
    %c0_52 = arith.constant 0 : index
    %c0_53 = arith.constant 0 : index
    %62 = vector.load %arg4[%c0_51, %c0_52, %c0_53] : memref<1x8x384xf32, #tpu.memory_space<vmem>>, vector<1x8x384xf32>
    %63 = vector.shape_cast %62 : vector<1x8x384xf32> to vector<8x384xf32>
    %64 = vector.shape_cast %61 : vector<8x384xf32> to vector<1x8x384xf32>
    tpu.vector_store %arg4[%c0_51, %c0_52, %c0_53], %64 {strides = array<i32>} : memref<1x8x384xf32, #tpu.memory_space<vmem>>, vector<1x8x384xf32>,
    return
  }
  func.func @transform_0(%arg0: i32) -> (i32, i32, i32) {
    %c0_i32 = arith.constant 0 : i32
    %c0_i32_0 = arith.constant 0 : i32
    %c0_i32_1 = arith.constant 0 : i32
    return %arg0, %c0_i32, %c0_i32_0 : i32, i32, i32
  }
  func.func @transform_1(%arg0: i32) -> (i32, i32, i32) {
    %c0_i32 = arith.constant 0 : i32
    %c0_i32_0 = arith.constant 0 : i32
    %c0_i32_1 = arith.constant 0 : i32
    %c0_i32_2 = arith.constant 0 : i32
    return %c0_i32, %c0_i32_0, %c0_i32_1 : i32, i32, i32
  }
  func.func @transform_2(%arg0: i32) -> (i32, i32) {
    %c0_i32 = arith.constant 0 : i32
    %c0_i32_0 = arith.constant 0 : i32
    %c0_i32_1 = arith.constant 0 : i32
    return %c0_i32, %c0_i32_0 : i32, i32
  }
  func.func @transform_3(%arg0: i32) -> (i32, i32, i32) {
    %c0_i32 = arith.constant 0 : i32
    %c0_i32_0 = arith.constant 0 : i32
    %c0_i32_1 = arith.constant 0 : i32
    return %arg0, %c0_i32, %c0_i32_0 : i32, i32, i32
  }
}

</mosaic_0001>

<llo_original>
// kernel: conv_bn_act.1
$region0: #{conv_bn_act.1}
  #allocation0 [shape = 'u32[]', space=smem, size = 0x4, offset = 0x4, fixed_abs, tag = 'smem constant byte address 0x4 - core index']
  #allocation1 [shape = 'u32[72,128]{1,0:T(1,128)}', space=vmem, size = 0x9000, scoped, tag = 'internal scratch']
  %s0 = inlined_call_operand.vmem [shape: bf16[2,16,512], index: 0, kind: input, shape index: {}]
  %s1 = inlined_call_operand.vmem [shape: bf16[9,8,16], index: 1, kind: input, shape index: {}]
  %s2 = inlined_call_operand.vmem [shape: f32[8,1], index: 2, kind: input, shape index: {}]
  %s3 = inlined_call_operand.vmem [shape: f32[2,8,384], index: 3, kind: output, shape index: {}]
  %s4 = sld [smem:[#allocation0]]
  $region45: #{conv_bn_act.1} parent=0
    _
  %s6 = ssub.s32 1, %s4
  %s7 = scalar_select 0, %s6, %s4
  loop: start=0, step=1, limit=4
  $region2: #{conv_bn_act.1} parent=0 // loop_pre_header
    _
  $region3: #{conv_bn_act.1} parent=0 // loop_header
    %s9 = sphi 0, %s13
    %p10 = scmp.ge.s32.totalorder %s9, 4
    %s19 = sphi 0, %s21
    %s22 = sphi 0, %s19
    %s23 = sphi 0, %s22
    %s39 = sphi 0, %s23
    %s43 = sphi 0, %s43
    %s45 = sphi 0, %s43
    %s46 = sphi 0, %s45
    %s60 = sphi 0, %s46
    %s64 = sphi 0, %s64
    %s66 = sphi 0, %s64
    %s67 = sphi 0, %s66
    %s81 = sphi 0, %s67
    %s87 = sphi 0, %s89
    %s90 = sphi 0, %s87
    %s91 = sphi 0, %s90
    %s107 = sphi 0, %s91
  $region4: #{conv_bn_act.1} parent=0 // loop_header_branch
    %12 = sbr.rel (%p10) target = $region8
  $region5: #{conv_bn_act.1} parent=0 // loop_body
    %s14 = ssub.s32 %s9, 1
    %s15 = ssub.s32 %s9, 2
    %s16 = sadd.s32 %s9, 1
    %s17 = ssub.s32 %s9, %s16
    %p18 = scmp.eq.s32.totalorder %s17, 0
    %s20 = sadd.s32 %s19, 1
    %s21 = scalar_select %p18, %s19, %s20
    %p24 = pneg %p18
    %p25 = scmp.eq.s32.totalorder %s9, 1
    %p26 = por %p24, %p25
    %p27 = scmp.ne.s32.totalorder %s19, %s22
    %p28 = scmp.eq.s32.totalorder %s9, 0
    %p29 = por %p27, %p28
    %p30 = scmp.ne.s32.totalorder %s19, %s22
    %p31 = scmp.eq.s32.totalorder %s14, 1
    %p32 = por %p30, %p31
    %p33 = scmp.ne.s32.totalorder %s22, %s23
    %p34 = scmp.eq.s32.totalorder %s14, 0
    %p35 = por %p33, %p34
    %p36 = scmp.ne.s32.totalorder %s22, %s23
    %p37 = scmp.eq.s32.totalorder %s15, 1
    %p38 = por %p36, %p37
    %p40 = scmp.ne.s32.totalorder %s23, %s39
    %p41 = scmp.eq.s32.totalorder %s15, 0
    %p42 = por %p40, %p41
    %s44 = sadd.s32 %s43, 1
    %p47 = scmp.eq.s32.totalorder %s9, 1
    %p48 = scmp.ne.s32.totalorder %s43, %s45
    %p49 = scmp.eq.s32.totalorder %s9, 0
    %p50 = por %p48, %p49
    %p51 = scmp.ne.s32.totalorder %s43, %s45
    %p52 = scmp.eq.s32.totalorder %s14, 1
    %p53 = por %p51, %p52
    %p54 = scmp.ne.s32.totalorder %s45, %s46
    %p55 = scmp.eq.s32.totalorder %s14, 0
    %p56 = por %p54, %p55
    %p57 = scmp.ne.s32.totalorder %s45, %s46
    %p58 = scmp.eq.s32.totalorder %s15, 1
    %p59 = por %p57, %p58
    %p61 = scmp.ne.s32.totalorder %s46, %s60
    %p62 = scmp.eq.s32.totalorder %s15, 0
    %p63 = por %p61, %p62
    %s65 = sadd.s32 %s64, 1
    %p68 = scmp.eq.s32.totalorder %s9, 1
    %p69 = scmp.ne.s32.totalorder %s64, %s66
    %p70 = scmp.eq.s32.totalorder %s9, 0
    %p71 = por %p69, %p70
    %p72 = scmp.ne.s32.totalorder %s64, %s66
    %p73 = scmp.eq.s32.totalorder %s14, 1
    %p74 = por %p72, %p73
    %p75 = scmp.ne.s32.totalorder %s66, %s67
    %p76 = scmp.eq.s32.totalorder %s14, 0
    %p77 = por %p75, %p76
    %p78 = scmp.ne.s32.totalorder %s66, %s67
    %p79 = scmp.eq.s32.totalorder %s15, 1
    %p80 = por %p78, %p79
    %p82 = scmp.ne.s32.totalorder %s67, %s81
    %p83 = scmp.eq.s32.totalorder %s15, 0
    %p84 = por %p82, %p83
    %s85 = ssub.s32 %s9, %s16
    %p86 = scmp.eq.s32.totalorder %s85, 0
    %s88 = sadd.s32 %s87, 1
    %s89 = scalar_select %p86, %s87, %s88
    %p92 = pneg %p86
    %p93 = scmp.eq.s32.totalorder %s9, 1
    %p94 = por %p92, %p93
    %p95 = scmp.ne.s32.totalorder %s87, %s90
    %p96 = scmp.eq.s32.totalorder %s9, 0
    %p97 = por %p95, %p96
    %p98 = scmp.ne.s32.totalorder %s87, %s90
    %p99 = scmp.eq.s32.totalorder %s14, 1
    %p100 = por %p98, %p99
    %p101 = scmp.ne.s32.totalorder %s90, %s91
    %p102 = scmp.eq.s32.totalorder %s14, 0
    %p103 = por %p101, %p102
    %p104 = scmp.ne.s32.totalorder %s90, %s91
    %p105 = scmp.eq.s32.totalorder %s15, 1
    %p106 = por %p104, %p105
    %p108 = scmp.ne.s32.totalorder %s91, %s107
    %p109 = scmp.eq.s32.totalorder %s15, 0
    %p110 = por %p108, %p109
    %p111 = scmp.le.s32.totalorder 1, %s9
    %p112 = scmp.lt.s32.totalorder %s9, 3
    %p113 = pnand %p111, %p112
    %p114 = pneg %p113
    // Predicated region
    $region9: #{conv_bn_act.1} parent=5 // pred_check
      _
    $region10: #{conv_bn_act.1} parent=5 // pred_check_branch
      %116 = sbr.rel (%p113) target = $region12
    $region11: #{conv_bn_act.1} parent=5 // pred_region
      %s117 = ssub.s32 %s9, 1
      // Predicated region
      $region13: #{conv_bn_act.1} parent=11 // pred_check
        %p118 = pneg %p56
      $region14: #{conv_bn_act.1} parent=11 // pred_check_branch
        %120 = sbr.rel (%p118) target = $region16
      $region15: #{conv_bn_act.1} parent=11 // pred_region
        _
      $region16: #{conv_bn_act.1} parent=11 // pred_fallthru
        _
      // Predicated region
      $region17: #{conv_bn_act.1} parent=11 // pred_check
        %p121 = pneg %p77
      $region18: #{conv_bn_act.1} parent=11 // pred_check_branch
        %123 = sbr.rel (%p121) target = $region20
      $region19: #{conv_bn_act.1} parent=11 // pred_region
        _
      $region20: #{conv_bn_act.1} parent=11 // pred_fallthru
        _
    $region12: #{conv_bn_act.1} parent=5 // pred_fallthru
      _
    %p124 = scmp.lt.s32.totalorder %s9, 2
    // Predicated region
    $region21: #{conv_bn_act.1} parent=5 // pred_check
      %p125 = pneg %p124
    $region22: #{conv_bn_act.1} parent=5 // pred_check_branch
      %127 = sbr.rel (%p125) target = $region24
    $region23: #{conv_bn_act.1} parent=5 // pred_region
      // Predicated region
      $region25: #{conv_bn_act.1} parent=23 // pred_check
        %p128 = pneg %p29
      $region26: #{conv_bn_act.1} parent=23 // pred_check_branch
        %130 = sbr.rel (%p128) target = $region28
      $region27: #{conv_bn_act.1} parent=23 // pred_region
        %p131 = scmp.lt.s32.totalorder %s9, 1
        %s132 = scalar_select %p131, %s9, 1
        %s133 = smul.addr %s132, 8
        %s134 = smul.addr %s133, 4
        %s135 = scalar_lea.vmem %s0, %s134
      $region28: #{conv_bn_act.1} parent=23 // pred_fallthru
        _
    $region24: #{conv_bn_act.1} parent=5 // pred_fallthru
      _
    %p136 = scmp.le.s32.totalorder 1, %s9
    %p137 = scmp.lt.s32.totalorder %s9, 3
    %p138 = pnand %p136, %p137
    %p139 = pneg %p138
    // Predicated region
    $region29: #{conv_bn_act.1} parent=5 // pred_check
      _
    $region30: #{conv_bn_act.1} parent=5 // pred_check_branch
      %141 = sbr.rel (%p138) target = $region32
    $region31: #{conv_bn_act.1} parent=5 // pred_region
      %s142 = ssub.s32 %s9, 1
      %p143 = scmp.lt.s32.totalorder %s14, 1
      %s144 = scalar_select %p143, %s14, 1
      %s145 = smul.addr %s144, 8
      %s146 = smul.addr %s145, 4
      %s147 = scalar_lea.vmem %s0, %s146
      %p148 = pneg %p35
      %p149 = pneg %p32
      %p150 = pneg %p56
      %p151 = pneg %p53
      %p152 = pneg %p77
      %p153 = pneg %p74
      %p154 = pneg %p103
      %p155 = pneg %p100
      %p156 = scmp.lt.s32.totalorder %s14, 1
      %s157 = scalar_select %p156, %s14, 1
      %s158 = smul.addr %s157, 3
      %s159 = smul.addr %s158, 8
      %s160 = scalar_lea.vmem %s3, %s159
      %p161 = scmp.lt.s32.totalorder %s14, 1
      %s162 = scalar_select %p161, %s14, 1
      %s163 = smul.addr %s162, 8
      %s164 = smul.addr %s163, 4
      %s165 = scalar_lea.vmem %s0, %s164
      %p166 = scmp.lt.s32.totalorder %s14, 1
      %s167 = scalar_select %p166, %s14, 1
      %s168 = smul.addr %s167, 3
      %s169 = smul.addr %s168, 8
      %s170 = scalar_lea.vmem %s3, %s169
      %v172 = vld [vmem:[%s165] sm:$0xff]
      %v173 = vld [vmem:[%s165 + $0x8] sm:$0xf]
      %v174 = vld [vmem:[%s165 + $0x10] sm:$0xff]
      %v175 = vld [vmem:[%s165 + $0x18] sm:$0xf]
      %v176 = vld [vmem:[%s1] sm:$0xf]
      %v177 = vld [vmem:[%s165] sm:$0xff]
      %v178 = vld [vmem:[%s165 + $0x8] sm:$0xff]
      %v179 = vld [vmem:[%s165 + $0x10] sm:$0xff]
      %v180 = vld [vmem:[%s165 + $0x18] sm:$0xff]
      %s181 = scalar_lea.vmem %s1, 4
      %v182 = vld [vmem:[%s181] sm:$0xf]
      %v187 = vunpack.c.l.b16 %v177
      %v188 = vunpack.c.h.b16 %v177
      %v189 = vunpack.c.l.b16 %v178
      %v190 = vunpack.c.h.b16 %v178
      %v191 = vunpack.c.l.b16 %v179
      %v192 = vunpack.c.h.b16 %v179
      %v193 = vunpack.c.l.b16 %v180
      %v194 = vunpack.c.h.b16 %v180
      %v195 = vpack.c.b16 %v191, %v187
      %v196 = vpack.c.b16 %v192, %v188
      %v197 = vpack.c.b16 %v193, %v189
      %v198 = vpack.c.b16 %v194, %v190
      %199 = vrot.lane.b32.xlu0 %v195, 127
      %v200 = vpop.permute.xlu0 %199
      %201 = vrot.lane.b32.xlu0 %v196, 127
      %v202 = vpop.permute.xlu0 %201
      %203 = vrot.lane.b32.xlu0 %v197, 127
      %v204 = vpop.permute.xlu0 %203
      %205 = vrot.lane.b32.xlu0 %v198, 127
      %v206 = vpop.permute.xlu0 %205
      %vm207 = vcmask 1039360
      %v208 = vsel %vm207, %v200, %v202
      %v209 = vsel %vm207, %v202, %v204
      %v210 = vsel %vm207, %v204, %v206
      %vm214 = vcmask 130048
      %v216 = vsel %vm214, %v182, 0
      %218 = vmatpush.bf16.msra.mxu0 0
      %219 = vmatpush.bf16.msra.mxu0 0
      %220 = vmatpush.bf16.msra.mxu0 0
      %221 = vmatpush.bf16.msra.mxu0 0
      %222 = vmatpush.bf16.msra.mxu0 0
      %223 = vmatpush.bf16.msra.mxu0 0
      %224 = vmatpush.bf16.msra.mxu0 0
      %225 = vmatpush.bf16.msra.mxu0 %v208
      %226 = vmatmul.bf16.gmra.mxu0 %v216
      %v227 = vpop.f32.mrf.mxu0
      %v228 = vadd.f32 0.0, %v227
      %v229 = vpop.f32.mrf.mxu0
      %230 = vdwg.mxu0
      %231 = vmatpush.bf16.msra.mxu0 0
      %232 = vmatpush.bf16.msra.mxu0 0
      %233 = vmatpush.bf16.msra.mxu0 0
      %234 = vmatpush.bf16.msra.mxu0 0
      %235 = vmatpush.bf16.msra.mxu0 0
      %236 = vmatpush.bf16.msra.mxu0 0
      %237 = vmatpush.bf16.msra.mxu0 0
      %238 = vmatpush.bf16.msra.mxu0 %v209
      %239 = vmatmul.bf16.gmra.mxu0 %v216
      %v240 = vpop.f32.mrf.mxu0
      %v241 = vadd.f32 0.0, %v240
      %v242 = vpop.f32.mrf.mxu0
      %243 = vdwg.mxu0
      %244 = vmatpush.bf16.msra.mxu0 0
      %245 = vmatpush.bf16.msra.mxu0 0
      %246 = vmatpush.bf16.msra.mxu0 0
      %247 = vmatpush.bf16.msra.mxu0 0
      %248 = vmatpush.bf16.msra.mxu0 0
      %249 = vmatpush.bf16.msra.mxu0 0
      %250 = vmatpush.bf16.msra.mxu0 0
      %251 = vmatpush.bf16.msra.mxu0 %v210
      %252 = vmatmul.bf16.gmra.mxu0 %v216
      %v253 = vpop.f32.mrf.mxu0
      %v254 = vadd.f32 0.0, %v253
      %v255 = vpop.f32.mrf.mxu0
      %256 = vdwg.mxu0
      %v261 = vunpack.c.l.b16 %v172
      %v262 = vunpack.c.h.b16 %v172
      %v263 = vunpack.c.l.b16 %v173
      %v264 = vunpack.c.l.b16 %v174
      %v265 = vunpack.c.h.b16 %v174
      %v266 = vunpack.c.l.b16 %v175
      %v267 = vpack.c.b16 %v264, %v261
      %v268 = vpack.c.b16 %v265, %v262
      %v269 = vpack.c.b16 %v266, %v263
      %v274 = vsel %vm214, %v176, 0
      %276 = vmatpush.bf16.msra.mxu0 0
      %277 = vmatpush.bf16.msra.mxu0 0
      %278 = vmatpush.bf16.msra.mxu0 0
      %279 = vmatpush.bf16.msra.mxu0 0
      %280 = vmatpush.bf16.msra.mxu0 0
      %281 = vmatpush.bf16.msra.mxu0 0
      %282 = vmatpush.bf16.msra.mxu0 0
      %283 = vmatpush.bf16.msra.mxu0 %v267
      %284 = vmatmul.bf16.gmra.mxu0 %v274
      %v285 = vpop.f32.mrf.mxu0
      %v286 = vadd.f32 %v228, %v285
      %v287 = vpop.f32.mrf.mxu0
      %288 = vdwg.mxu0
      %289 = vmatpush.bf16.msra.mxu0 0
      %290 = vmatpush.bf16.msra.mxu0 0
      %291 = vmatpush.bf16.msra.mxu0 0
      %292 = vmatpush.bf16.msra.mxu0 0
      %293 = vmatpush.bf16.msra.mxu0 0
      %294 = vmatpush.bf16.msra.mxu0 0
      %295 = vmatpush.bf16.msra.mxu0 0
      %296 = vmatpush.bf16.msra.mxu0 %v268
      %297 = vmatmul.bf16.gmra.mxu0 %v274
      %v298 = vpop.f32.mrf.mxu0
      %v299 = vadd.f32 %v241, %v298
      %v300 = vpop.f32.mrf.mxu0
      %301 = vdwg.mxu0
      %302 = vmatpush.bf16.msra.mxu0 0
      %303 = vmatpush.bf16.msra.mxu0 0
      %304 = vmatpush.bf16.msra.mxu0 0
      %305 = vmatpush.bf16.msra.mxu0 0
      %306 = vmatpush.bf16.msra.mxu0 0
      %307 = vmatpush.bf16.msra.mxu0 0
      %308 = vmatpush.bf16.msra.mxu0 0
      %309 = vmatpush.bf16.msra.mxu0 %v269
      %310 = vmatmul.bf16.gmra.mxu0 %v274
      %v311 = vpop.f32.mrf.mxu0
      %v312 = vadd.f32 %v254, %v311
      %v313 = vpop.f32.mrf.mxu0
      %314 = vdwg.mxu0
      %s315 = scalar_lea.vmem %s1, 8
      %v316 = vld [vmem:[%s315] sm:$0xf]
      %317 = vrot.lane.b32.xlu0 %v195, 126
      %v318 = vpop.permute.xlu0 %317
      %319 = vrot.lane.b32.xlu0 %v196, 126
      %v320 = vpop.permute.xlu0 %319
      %321 = vrot.lane.b32.xlu0 %v197, 126
      %v322 = vpop.permute.xlu0 %321
      %323 = vrot.lane.b32.xlu0 %v198, 126
      %v324 = vpop.permute.xlu0 %323
      %vm325 = vcmask 1031168
      %v326 = vsel %vm325, %v318, %v320
      %v327 = vsel %vm325, %v320, %v322
      %v328 = vsel %vm325, %v322, %v324
      %v333 = vsel %vm214, %v316, 0
      %335 = vmatpush.bf16.msra.mxu0 0
      %336 = vmatpush.bf16.msra.mxu0 0
      %337 = vmatpush.bf16.msra.mxu0 0
      %338 = vmatpush.bf16.msra.mxu0 0
      %339 = vmatpush.bf16.msra.mxu0 0
      %340 = vmatpush.bf16.msra.mxu0 0
      %341 = vmatpush.bf16.msra.mxu0 0
      %342 = vmatpush.bf16.msra.mxu0 %v326
      %343 = vmatmul.bf16.gmra.mxu0 %v333
      %v344 = vpop.f32.mrf.mxu0
      %v345 = vadd.f32 0.0, %v344
      %v346 = vpop.f32.mrf.mxu0
      %347 = vdwg.mxu0
      %348 = vmatpush.bf16.msra.mxu0 0
      %349 = vmatpush.bf16.msra.mxu0 0
      %350 = vmatpush.bf16.msra.mxu0 0
      %351 = vmatpush.bf16.msra.mxu0 0
      %352 = vmatpush.bf16.msra.mxu0 0
      %353 = vmatpush.bf16.msra.mxu0 0
      %354 = vmatpush.bf16.msra.mxu0 0
      %355 = vmatpush.bf16.msra.mxu0 %v327
      %356 = vmatmul.bf16.gmra.mxu0 %v333
      %v357 = vpop.f32.mrf.mxu0
      %v358 = vadd.f32 0.0, %v357
      %v359 = vpop.f32.mrf.mxu0
      %360 = vdwg.mxu0
      %361 = vmatpush.bf16.msra.mxu0 0
      %362 = vmatpush.bf16.msra.mxu0 0
      %363 = vmatpush.bf16.msra.mxu0 0
      %364 = vmatpush.bf16.msra.mxu0 0
      %365 = vmatpush.bf16.msra.mxu0 0
      %366 = vmatpush.bf16.msra.mxu0 0
      %367 = vmatpush.bf16.msra.mxu0 0
      %368 = vmatpush.bf16.msra.mxu0 %v328
      %369 = vmatmul.bf16.gmra.mxu0 %v333
      %v370 = vpop.f32.mrf.mxu0
      %v371 = vadd.f32 0.0, %v370
      %v372 = vpop.f32.mrf.mxu0
      %373 = vdwg.mxu0
      %v374 = vadd.f32 %v286, %v345
      %v375 = vadd.f32 %v299, %v358
      %v376 = vadd.f32 %v312, %v371
      %s377 = scalar_lea.vmem %s1, 12
      %v378 = vld [vmem:[%s377] sm:$0xf]
      %379 = vrot.lane.b32.xlu0 %v195, 110
      %v380 = vpop.permute.xlu0 %379
      %381 = vrot.lane.b32.xlu0 %v196, 110
      %v382 = vpop.permute.xlu0 %381
      %383 = vrot.lane.b32.xlu0 %v197, 110
      %v384 = vpop.permute.xlu0 %383
      %385 = vrot.lane.b32.xlu0 %v198, 110
      %v386 = vpop.permute.xlu0 %385
      %vm387 = vcmask 900096
      %v388 = vsel %vm387, %v380, %v382
      %v389 = vsel %vm387, %v382, %v384
      %v390 = vsel %vm387, %v384, %v386
      %v395 = vsel %vm214, %v378, 0
      %397 = vmatpush.bf16.msra.mxu0 0
      %398 = vmatpush.bf16.msra.mxu0 0
      %399 = vmatpush.bf16.msra.mxu0 0
      %400 = vmatpush.bf16.msra.mxu0 0
      %401 = vmatpush.bf16.msra.mxu0 0
      %402 = vmatpush.bf16.msra.mxu0 0
      %403 = vmatpush.bf16.msra.mxu0 0
      %404 = vmatpush.bf16.msra.mxu0 %v388
      %405 = vmatmul.bf16.gmra.mxu0 %v395
      %v406 = vpop.f32.mrf.mxu0
      %v407 = vadd.f32 0.0, %v406
      %v408 = vpop.f32.mrf.mxu0
      %409 = vdwg.mxu0
      %410 = vmatpush.bf16.msra.mxu0 0
      %411 = vmatpush.bf16.msra.mxu0 0
      %412 = vmatpush.bf16.msra.mxu0 0
      %413 = vmatpush.bf16.msra.mxu0 0
      %414 = vmatpush.bf16.msra.mxu0 0
      %415 = vmatpush.bf16.msra.mxu0 0
      %416 = vmatpush.bf16.msra.mxu0 0
      %417 = vmatpush.bf16.msra.mxu0 %v389
      %418 = vmatmul.bf16.gmra.mxu0 %v395
      %v419 = vpop.f32.mrf.mxu0
      %v420 = vadd.f32 0.0, %v419
      %v421 = vpop.f32.mrf.mxu0
      %422 = vdwg.mxu0
      %423 = vmatpush.bf16.msra.mxu0 0
      %424 = vmatpush.bf16.msra.mxu0 0
      %425 = vmatpush.bf16.msra.mxu0 0
      %426 = vmatpush.bf16.msra.mxu0 0
      %427 = vmatpush.bf16.msra.mxu0 0
      %428 = vmatpush.bf16.msra.mxu0 0
      %429 = vmatpush.bf16.msra.mxu0 0
      %430 = vmatpush.bf16.msra.mxu0 %v390
      %431 = vmatmul.bf16.gmra.mxu0 %v395
      %v432 = vpop.f32.mrf.mxu0
      %v433 = vadd.f32 0.0, %v432
      %v434 = vpop.f32.mrf.mxu0
      %435 = vdwg.mxu0
      %v436 = vadd.f32 %v374, %v407
      %v437 = vadd.f32 %v375, %v420
      %v438 = vadd.f32 %v376, %v433
      %s439 = scalar_lea.vmem %s1, 16
      %v440 = vld [vmem:[%s439] sm:$0xf]
      %441 = vrot.lane.b32.xlu0 %v195, 109
      %v442 = vpop.permute.xlu0 %441
      %443 = vrot.lane.b32.xlu0 %v196, 109
      %v444 = vpop.permute.xlu0 %443
      %445 = vrot.lane.b32.xlu0 %v197, 109
      %v446 = vpop.permute.xlu0 %445
      %447 = vrot.lane.b32.xlu0 %v198, 109
      %v448 = vpop.permute.xlu0 %447
      %vm449 = vcmask 891904
      %v450 = vsel %vm449, %v442, %v444
      %v451 = vsel %vm449, %v444, %v446
      %v452 = vsel %vm449, %v446, %v448
      %v457 = vsel %vm214, %v440, 0
      %459 = vmatpush.bf16.msra.mxu0 0
      %460 = vmatpush.bf16.msra.mxu0 0
      %461 = vmatpush.bf16.msra.mxu0 0
      %462 = vmatpush.bf16.msra.mxu0 0
      %463 = vmatpush.bf16.msra.mxu0 0
      %464 = vmatpush.bf16.msra.mxu0 0
      %465 = vmatpush.bf16.msra.mxu0 0
      %466 = vmatpush.bf16.msra.mxu0 %v450
      %467 = vmatmul.bf16.gmra.mxu0 %v457
      %v468 = vpop.f32.mrf.mxu0
      %v469 = vadd.f32 0.0, %v468
      %v470 = vpop.f32.mrf.mxu0
      %471 = vdwg.mxu0
      %472 = vmatpush.bf16.msra.mxu0 0
      %473 = vmatpush.bf16.msra.mxu0 0
      %474 = vmatpush.bf16.msra.mxu0 0
      %475 = vmatpush.bf16.msra.mxu0 0
      %476 = vmatpush.bf16.msra.mxu0 0
      %477 = vmatpush.bf16.msra.mxu0 0
      %478 = vmatpush.bf16.msra.mxu0 0
      %479 = vmatpush.bf16.msra.mxu0 %v451
      %480 = vmatmul.bf16.gmra.mxu0 %v457
      %v481 = vpop.f32.mrf.mxu0
      %v482 = vadd.f32 0.0, %v481
      %v483 = vpop.f32.mrf.mxu0
      %484 = vdwg.mxu0
      %485 = vmatpush.bf16.msra.mxu0 0
      %486 = vmatpush.bf16.msra.mxu0 0
      %487 = vmatpush.bf16.msra.mxu0 0
      %488 = vmatpush.bf16.msra.mxu0 0
      %489 = vmatpush.bf16.msra.mxu0 0
      %490 = vmatpush.bf16.msra.mxu0 0
      %491 = vmatpush.bf16.msra.mxu0 0
      %492 = vmatpush.bf16.msra.mxu0 %v452
      %493 = vmatmul.bf16.gmra.mxu0 %v457
      %v494 = vpop.f32.mrf.mxu0
      %v495 = vadd.f32 0.0, %v494
      %v496 = vpop.f32.mrf.mxu0
      %497 = vdwg.mxu0
      %v498 = vadd.f32 %v436, %v469
      %v499 = vadd.f32 %v437, %v482
      %v500 = vadd.f32 %v438, %v495
      %s501 = scalar_lea.vmem %s1, 20
      %v502 = vld [vmem:[%s501] sm:$0xf]
      %503 = vrot.lane.b32.xlu0 %v195, 108
      %v504 = vpop.permute.xlu0 %503
      %505 = vrot.lane.b32.xlu0 %v196, 108
      %v506 = vpop.permute.xlu0 %505
      %507 = vrot.lane.b32.xlu0 %v197, 108
      %v508 = vpop.permute.xlu0 %507
      %509 = vrot.lane.b32.xlu0 %v198, 108
      %v510 = vpop.permute.xlu0 %509
      %vm511 = vcmask 883712
      %v512 = vsel %vm511, %v504, %v506
      %v513 = vsel %vm511, %v506, %v508
      %v514 = vsel %vm511, %v508, %v510
      %v519 = vsel %vm214, %v502, 0
      %521 = vmatpush.bf16.msra.mxu0 0
      %522 = vmatpush.bf16.msra.mxu0 0
      %523 = vmatpush.bf16.msra.mxu0 0
      %524 = vmatpush.bf16.msra.mxu0 0
      %525 = vmatpush.bf16.msra.mxu0 0
      %526 = vmatpush.bf16.msra.mxu0 0
      %527 = vmatpush.bf16.msra.mxu0 0
      %528 = vmatpush.bf16.msra.mxu0 %v512
      %529 = vmatmul.bf16.gmra.mxu0 %v519
      %v530 = vpop.f32.mrf.mxu0
      %v531 = vadd.f32 0.0, %v530
      %v532 = vpop.f32.mrf.mxu0
      %533 = vdwg.mxu0
      %534 = vmatpush.bf16.msra.mxu0 0
      %535 = vmatpush.bf16.msra.mxu0 0
      %536 = vmatpush.bf16.msra.mxu0 0
      %537 = vmatpush.bf16.msra.mxu0 0
      %538 = vmatpush.bf16.msra.mxu0 0
      %539 = vmatpush.bf16.msra.mxu0 0
      %540 = vmatpush.bf16.msra.mxu0 0
      %541 = vmatpush.bf16.msra.mxu0 %v513
      %542 = vmatmul.bf16.gmra.mxu0 %v519
      %v543 = vpop.f32.mrf.mxu0
      %v544 = vadd.f32 0.0, %v543
      %v545 = vpop.f32.mrf.mxu0
      %546 = vdwg.mxu0
      %547 = vmatpush.bf16.msra.mxu0 0
      %548 = vmatpush.bf16.msra.mxu0 0
      %549 = vmatpush.bf16.msra.mxu0 0
      %550 = vmatpush.bf16.msra.mxu0 0
      %551 = vmatpush.bf16.msra.mxu0 0
      %552 = vmatpush.bf16.msra.mxu0 0
      %553 = vmatpush.bf16.msra.mxu0 0
      %554 = vmatpush.bf16.msra.mxu0 %v514
      %555 = vmatmul.bf16.gmra.mxu0 %v519
      %v556 = vpop.f32.mrf.mxu0
      %v557 = vadd.f32 0.0, %v556
      %v558 = vpop.f32.mrf.mxu0
      %559 = vdwg.mxu0
      %v560 = vadd.f32 %v498, %v531
      %v561 = vadd.f32 %v499, %v544
      %v562 = vadd.f32 %v500, %v557
      %s563 = scalar_lea.vmem %s1, 24
      %v564 = vld [vmem:[%s563] sm:$0xf]
      %565 = vrot.lane.b32.xlu0 %v195, 92
      %v566 = vpop.permute.xlu0 %565
      %567 = vrot.lane.b32.xlu0 %v196, 92
      %v568 = vpop.permute.xlu0 %567
      %569 = vrot.lane.b32.xlu0 %v197, 92
      %v570 = vpop.permute.xlu0 %569
      %571 = vrot.lane.b32.xlu0 %v198, 92
      %v572 = vpop.permute.xlu0 %571
      %vm573 = vcmask 752640
      %v574 = vsel %vm573, %v566, %v568
      %v575 = vsel %vm573, %v568, %v570
      %v576 = vsel %vm573, %v570, %v572
      %v581 = vsel %vm214, %v564, 0
      %583 = vmatpush.bf16.msra.mxu0 0
      %584 = vmatpush.bf16.msra.mxu0 0
      %585 = vmatpush.bf16.msra.mxu0 0
      %586 = vmatpush.bf16.msra.mxu0 0
      %587 = vmatpush.bf16.msra.mxu0 0
      %588 = vmatpush.bf16.msra.mxu0 0
      %589 = vmatpush.bf16.msra.mxu0 0
      %590 = vmatpush.bf16.msra.mxu0 %v574
      %591 = vmatmul.bf16.gmra.mxu0 %v581
      %v592 = vpop.f32.mrf.mxu0
      %v593 = vadd.f32 0.0, %v592
      %v594 = vpop.f32.mrf.mxu0
      %595 = vdwg.mxu0
      %596 = vmatpush.bf16.msra.mxu0 0
      %597 = vmatpush.bf16.msra.mxu0 0
      %598 = vmatpush.bf16.msra.mxu0 0
      %599 = vmatpush.bf16.msra.mxu0 0
      %600 = vmatpush.bf16.msra.mxu0 0
      %601 = vmatpush.bf16.msra.mxu0 0
      %602 = vmatpush.bf16.msra.mxu0 0
      %603 = vmatpush.bf16.msra.mxu0 %v575
      %604 = vmatmul.bf16.gmra.mxu0 %v581
      %v605 = vpop.f32.mrf.mxu0
      %v606 = vadd.f32 0.0, %v605
      %v607 = vpop.f32.mrf.mxu0
      %608 = vdwg.mxu0
      %609 = vmatpush.bf16.msra.mxu0 0
      %610 = vmatpush.bf16.msra.mxu0 0
      %611 = vmatpush.bf16.msra.mxu0 0
      %612 = vmatpush.bf16.msra.mxu0 0
      %613 = vmatpush.bf16.msra.mxu0 0
      %614 = vmatpush.bf16.msra.mxu0 0
      %615 = vmatpush.bf16.msra.mxu0 0
      %616 = vmatpush.bf16.msra.mxu0 %v576
      %617 = vmatmul.bf16.gmra.mxu0 %v581
      %v618 = vpop.f32.mrf.mxu0
      %v619 = vadd.f32 0.0, %v618
      %v620 = vpop.f32.mrf.mxu0
      %621 = vdwg.mxu0
      %v622 = vadd.f32 %v560, %v593
      %v623 = vadd.f32 %v561, %v606
      %v624 = vadd.f32 %v562, %v619
      %s625 = scalar_lea.vmem %s1, 28
      %v626 = vld [vmem:[%s625] sm:$0xf]
      %627 = vrot.lane.b32.xlu0 %v195, 91
      %v628 = vpop.permute.xlu0 %627
      %629 = vrot.lane.b32.xlu0 %v196, 91
      %v630 = vpop.permute.xlu0 %629
      %631 = vrot.lane.b32.xlu0 %v197, 91
      %v632 = vpop.permute.xlu0 %631
      %633 = vrot.lane.b32.xlu0 %v198, 91
      %v634 = vpop.permute.xlu0 %633
      %vm635 = vcmask 744448
      %v636 = vsel %vm635, %v628, %v630
      %v637 = vsel %vm635, %v630, %v632
      %v638 = vsel %vm635, %v632, %v634
      %v643 = vsel %vm214, %v626, 0
      %645 = vmatpush.bf16.msra.mxu0 0
      %646 = vmatpush.bf16.msra.mxu0 0
      %647 = vmatpush.bf16.msra.mxu0 0
      %648 = vmatpush.bf16.msra.mxu0 0
      %649 = vmatpush.bf16.msra.mxu0 0
      %650 = vmatpush.bf16.msra.mxu0 0
      %651 = vmatpush.bf16.msra.mxu0 0
      %652 = vmatpush.bf16.msra.mxu0 %v636
      %653 = vmatmul.bf16.gmra.mxu0 %v643
      %v654 = vpop.f32.mrf.mxu0
      %v655 = vadd.f32 0.0, %v654
      %v656 = vpop.f32.mrf.mxu0
      %657 = vdwg.mxu0
      %658 = vmatpush.bf16.msra.mxu0 0
      %659 = vmatpush.bf16.msra.mxu0 0
      %660 = vmatpush.bf16.msra.mxu0 0
      %661 = vmatpush.bf16.msra.mxu0 0
      %662 = vmatpush.bf16.msra.mxu0 0
      %663 = vmatpush.bf16.msra.mxu0 0
      %664 = vmatpush.bf16.msra.mxu0 0
      %665 = vmatpush.bf16.msra.mxu0 %v637
      %666 = vmatmul.bf16.gmra.mxu0 %v643
      %v667 = vpop.f32.mrf.mxu0
      %v668 = vadd.f32 0.0, %v667
      %v669 = vpop.f32.mrf.mxu0
      %670 = vdwg.mxu0
      %671 = vmatpush.bf16.msra.mxu0 0
      %672 = vmatpush.bf16.msra.mxu0 0
      %673 = vmatpush.bf16.msra.mxu0 0
      %674 = vmatpush.bf16.msra.mxu0 0
      %675 = vmatpush.bf16.msra.mxu0 0
      %676 = vmatpush.bf16.msra.mxu0 0
      %677 = vmatpush.bf16.msra.mxu0 0
      %678 = vmatpush.bf16.msra.mxu0 %v638
      %679 = vmatmul.bf16.gmra.mxu0 %v643
      %v680 = vpop.f32.mrf.mxu0
      %v681 = vadd.f32 0.0, %v680
      %v682 = vpop.f32.mrf.mxu0
      %683 = vdwg.mxu0
      %v684 = vadd.f32 %v622, %v655
      %v685 = vadd.f32 %v623, %v668
      %v686 = vadd.f32 %v624, %v681
      %s687 = scalar_lea.vmem %s1, 32
      %v688 = vld [vmem:[%s687] sm:$0xf]
      %689 = vrot.lane.b32.xlu0 %v195, 90
      %v690 = vpop.permute.xlu0 %689
      %691 = vrot.lane.b32.xlu0 %v196, 90
      %v692 = vpop.permute.xlu0 %691
      %693 = vrot.lane.b32.xlu0 %v197, 90
      %v694 = vpop.permute.xlu0 %693
      %695 = vrot.lane.b32.xlu0 %v198, 90
      %v696 = vpop.permute.xlu0 %695
      %vm697 = vcmask 736256
      %v698 = vsel %vm697, %v690, %v692
      %v699 = vsel %vm697, %v692, %v694
      %v700 = vsel %vm697, %v694, %v696
      %v705 = vsel %vm214, %v688, 0
      %707 = vmatpush.bf16.msra.mxu0 0
      %708 = vmatpush.bf16.msra.mxu0 0
      %709 = vmatpush.bf16.msra.mxu0 0
      %710 = vmatpush.bf16.msra.mxu0 0
      %711 = vmatpush.bf16.msra.mxu0 0
      %712 = vmatpush.bf16.msra.mxu0 0
      %713 = vmatpush.bf16.msra.mxu0 0
      %714 = vmatpush.bf16.msra.mxu0 %v698
      %715 = vmatmul.bf16.gmra.mxu0 %v705
      %v716 = vpop.f32.mrf.mxu0
      %v717 = vadd.f32 0.0, %v716
      %v718 = vpop.f32.mrf.mxu0
      %719 = vdwg.mxu0
      %720 = vmatpush.bf16.msra.mxu0 0
      %721 = vmatpush.bf16.msra.mxu0 0
      %722 = vmatpush.bf16.msra.mxu0 0
      %723 = vmatpush.bf16.msra.mxu0 0
      %724 = vmatpush.bf16.msra.mxu0 0
      %725 = vmatpush.bf16.msra.mxu0 0
      %726 = vmatpush.bf16.msra.mxu0 0
      %727 = vmatpush.bf16.msra.mxu0 %v699
      %728 = vmatmul.bf16.gmra.mxu0 %v705
      %v729 = vpop.f32.mrf.mxu0
      %v730 = vadd.f32 0.0, %v729
      %v731 = vpop.f32.mrf.mxu0
      %732 = vdwg.mxu0
      %733 = vmatpush.bf16.msra.mxu0 0
      %734 = vmatpush.bf16.msra.mxu0 0
      %735 = vmatpush.bf16.msra.mxu0 0
      %736 = vmatpush.bf16.msra.mxu0 0
      %737 = vmatpush.bf16.msra.mxu0 0
      %738 = vmatpush.bf16.msra.mxu0 0
      %739 = vmatpush.bf16.msra.mxu0 0
      %740 = vmatpush.bf16.msra.mxu0 %v700
      %741 = vmatmul.bf16.gmra.mxu0 %v705
      %v742 = vpop.f32.mrf.mxu0
      %v743 = vadd.f32 0.0, %v742
      %v744 = vpop.f32.mrf.mxu0
      %745 = vdwg.mxu0
      %v746 = vadd.f32 %v684, %v717
      %v747 = vadd.f32 %v685, %v730
      %v748 = vadd.f32 %v686, %v743
      %v749 = vld [vmem:[%s2] sm:$0xff]
      %751 = vset.pattern.permute.xlu0 0
      %752 = vperm.xlu0 %751, %v749
      %v753 = vpop.permute.xlu0 %752
      %v755 = vadd.f32 %v746, %v753
      %v756 = vadd.f32 %v747, %v753
      %v757 = vadd.f32 %v748, %v753
      %v758 = vsub.f32 0.0, %v755
      %v759 = vsub.f32 0.0, %v756
      %v760 = vsub.f32 0.0, %v757
      %v761 = vmul.f32 %v758, 1.442695
      %v762 = vpow.pop %v761
      %v763 = vmul.f32 %v759, 1.442695
      %v764 = vpow.pop %v763
      %v765 = vmul.f32 %v760, 1.442695
      %v766 = vpow.pop %v765
      %v767 = vadd.f32 %v762, 1.0
      %v768 = vadd.f32 %v764, 1.0
      %v769 = vadd.f32 %v766, 1.0
      %v770 = vrcp.pop %v767
      %v771 = vmul.f32 %v767, %v770
      %v772 = vsub.f32 1.0, %v771
      %v773 = vmul.f32 %v770, %v772
      %v774 = vadd.f32 %v770, %v773
      %vm775 = vweird.f32 %v767
      %vm776 = vweird.f32 %v770
      %vm777 = vmor %vm775, %vm776
      %v778 = vsel %vm777, %v770, %v774
      %v779 = vand.u32 2147483647, %v767
      %vm780 = vcmp.eq.f32.partialorder %v779, 8.507059e+37
      %v781 = vand.u32 %v767, 2147483648
      %v782 = vor.u32 1.1754944e-38, %v781
      %v783 = vsel %vm780, %v782, %v778
      %v784 = vmul.f32 %v755, %v783
      %v785 = vrcp.pop %v768
      %v786 = vmul.f32 %v768, %v785
      %v787 = vsub.f32 1.0, %v786
      %v788 = vmul.f32 %v785, %v787
      %v789 = vadd.f32 %v785, %v788
      %vm790 = vweird.f32 %v768
      %vm791 = vweird.f32 %v785
      %vm792 = vmor %vm790, %vm791
      %v793 = vsel %vm792, %v785, %v789
      %v794 = vand.u32 2147483647, %v768
      %vm795 = vcmp.eq.f32.partialorder %v794, 8.507059e+37
      %v796 = vand.u32 %v768, 2147483648
      %v797 = vor.u32 1.1754944e-38, %v796
      %v798 = vsel %vm795, %v797, %v793
      %v799 = vmul.f32 %v756, %v798
      %v800 = vrcp.pop %v769
      %v801 = vmul.f32 %v769, %v800
      %v802 = vsub.f32 1.0, %v801
      %v803 = vmul.f32 %v800, %v802
      %v804 = vadd.f32 %v800, %v803
      %vm805 = vweird.f32 %v769
      %vm806 = vweird.f32 %v800
      %vm807 = vmor %vm805, %vm806
      %v808 = vsel %vm807, %v800, %v804
      %v809 = vand.u32 2147483647, %v769
      %vm810 = vcmp.eq.f32.partialorder %v809, 8.507059e+37
      %v811 = vand.u32 %v769, 2147483648
      %v812 = vor.u32 1.1754944e-38, %v811
      %v813 = vsel %vm810, %v812, %v808
      %v814 = vmul.f32 %v757, %v813
      %815 = vst [vmem:[%s170] sm:$0xff] %v784
      %816 = vst [vmem:[%s170 + $0x8] sm:$0xff] %v799
      %817 = vst [vmem:[%s170 + $0x10] sm:$0xff] %v814
      %p818 = scmp.lt.s32.totalorder %s14, 1
      %s819 = scalar_select %p818, %s14, 1
      %s820 = smul.addr %s819, 3
      %s821 = smul.addr %s820, 8
      %s822 = scalar_lea.vmem %s3, %s821
      // Predicated region
      $region33: #{conv_bn_act.1} parent=31 // pred_check
        %p823 = pneg %p100
      $region34: #{conv_bn_act.1} parent=31 // pred_check_branch
        %825 = sbr.rel (%p823) target = $region36
      $region35: #{conv_bn_act.1} parent=31 // pred_region
        _
      $region36: #{conv_bn_act.1} parent=31 // pred_fallthru
        _
    $region32: #{conv_bn_act.1} parent=5 // pred_fallthru
      _
    %p826 = scmp.le.s32.totalorder 2, %s9
    // Predicated region
    $region37: #{conv_bn_act.1} parent=5 // pred_check
      %p827 = pneg %p826
    $region38: #{conv_bn_act.1} parent=5 // pred_check_branch
      %829 = sbr.rel (%p827) target = $region40
    $region39: #{conv_bn_act.1} parent=5 // pred_region
      %s830 = ssub.s32 %s9, 2
      // Predicated region
      $region41: #{conv_bn_act.1} parent=39 // pred_check
        %p831 = pneg %p106
      $region42: #{conv_bn_act.1} parent=39 // pred_check_branch
        %833 = sbr.rel (%p831) target = $region44
      $region43: #{conv_bn_act.1} parent=39 // pred_region
        %p834 = scmp.lt.s32.totalorder %s15, 1
        %s835 = scalar_select %p834, %s15, 1
        %s836 = smul.addr %s835, 3
        %s837 = smul.addr %s836, 8
        %s838 = scalar_lea.vmem %s3, %s837
      $region44: #{conv_bn_act.1} parent=39 // pred_fallthru
        _
    $region40: #{conv_bn_act.1} parent=5 // pred_fallthru
      _
  $region6: #{conv_bn_act.1} parent=0 // loop_footer
    %s13 = sadd.s32 1, %s9
  $region7: #{conv_bn_act.1} parent=0 // loop_footer_branch
    %8 = sbr.rel target = $region3
  $region8: #{conv_bn_act.1} parent=0 // loop_exit
    _

</llo_original>
